<compile_context>
chip_gen: v6e
topology: v6e:2x2x1
jax: 0.10.0
libtpu: 0.0.40
codegen_flags: <defaults>
</compile_context>

<pallas_src>
import jax
import jax.numpy as jnp
from jax import lax
from jax.experimental import pallas as pl
from jax.experimental.pallas import tpu as pltpu

LANE = 128      # TPU lane width (hidden-layer feature padding target)
SUBLANE = 8     # sublane granularity (batch-tile alignment)


def _round_up(n, m):
    return ((n + m - 1) // m) * m


# ----------------------------------------------------------------------------
# Fused kernel factory
# ----------------------------------------------------------------------------
def _make_decoder_kernel(layer_meta, *, norm, final, eps, compute_dtype):
    """Kernel computing the full decoder on one [TB, in_f] batch tile.

    Signature: kernel(x_ref, vec_ref, w0, w1, ..., wL, o_ref)
      - x_ref  : [TB, in_f]  activations block (pipelined per grid step)
      - vec_ref: [R, VP]     packed bias/gamma/beta rows (VMEM-resident)
      - w_i    : [in_pad_i, out_pad_i] pre-transposed weights (VMEM-resident)
    """
    n_layers = len(layer_meta)

    def kernel(x_ref, vec_ref, *rest):
        o_ref = rest[-1]
        w_refs = rest[:-1]
        h = x_ref[...].astype(jnp.float32)           # [TB, in_f]
        for i, m in enumerate(layer_meta):
            width = m["out_pad"]
            b = vec_ref[m["bias_row"]:m["bias_row"] + 1, 0:width]   # [1, width]
            # MXU matmul, f32 accumulation.
            y = jnp.dot(h.astype(compute_dtype), w_refs[i][...],
                        preferred_element_type=jnp.float32)
            y = y + b

            if not m["is_last"]:
                if norm:
                    g = vec_ref[m["gamma_row"]:m["gamma_row"] + 1, 0:width]
                    be = vec_ref[m["beta_row"]:m["beta_row"] + 1, 0:width]
                    # Padded columns of y are exactly 0 (zero weight columns +
                    # zero bias), so one-pass sums over the padded row equal
                    # sums over the true n_true features.
                    inv_n = 1.0 / float(m["n_true"])
                    s1 = jnp.sum(y, axis=-1, keepdims=True)
                    s2 = jnp.sum(y * y, axis=-1, keepdims=True)
                    mean = s1 * inv_n
                    var = s2 * inv_n - mean * mean
                    y = (y - mean) * lax.rsqrt(var + eps)           # EUP rsqrt
                    # gamma/beta are zero-padded -> padded cols return to 0.
                    y = y * g + be
                h = jnp.maximum(y, 0.0)              # ReLU (dropout p=0 => id)
            else:
                if final == "relu":
                    y = jnp.maximum(y, 0.0)
                elif final == "sigmoid":
                    y = jax.nn.sigmoid(y)            # EUP
                o_ref[...] = y.astype(o_ref.dtype)

    return kernel


# ----------------------------------------------------------------------------
# Parameter preparation: transpose + pad ONCE; pack small vectors together
# ----------------------------------------------------------------------------
def prepare_decoder_params(params, *, norm, compute_dtype=jnp.float32):
    """Returns (weights, packed_vectors, per-layer metadata).

    Weights are stored PyTorch-style [out, in]; here they become
    [in_pad, out_pad] (pre-transposed, zero-padded, cast to compute_dtype).
      * layer 0:      in_pad = in_f (no K padding of the input needed)
      * last layer:   out_pad = out_f (output written at its true width)
      * hidden layers: dims lane-padded to multiples of 128.
    All bias / gamma / beta vectors are packed into one [R, VP] f32 array.
    """
    n = len(params)
    dims = []
    for i, p in enumerate(params):
        out_f, in_f = p["w"].shape
        is_last = i == n - 1
        in_pad = in_f if i == 0 else _round_up(in_f, LANE)
        out_pad = out_f if is_last else _round_up(out_f, LANE)
        dims.append((in_f, in_pad, out_f, out_pad, is_last))
    vp = max(d[3] for d in dims)

    weights, rows, meta = [], [], []
    for p, (in_f, in_pad, out_f, out_pad, is_last) in zip(params, dims):
        wt = jnp.zeros((in_pad, out_pad), compute_dtype)
        wt = wt.at[:in_f, :out_f].set(
            jnp.asarray(p["w"], jnp.float32).T.astype(compute_dtype))
        weights.append(wt)

        def padrow(v):
            r = jnp.zeros((vp,), jnp.float32)
            return r.at[:out_f].set(jnp.asarray(v, jnp.float32))

        m = dict(n_true=out_f, out_pad=out_pad, in_true=in_f, in_pad=in_pad,
                 is_last=is_last, bias_row=len(rows), gamma_row=-1, beta_row=-1)
        rows.append(padrow(p["b"]))
        if (not is_last) and norm:
            m["gamma_row"] = len(rows)
            rows.append(padrow(p["gamma"]))
            m["beta_row"] = len(rows)
            rows.append(padrow(p["beta"]))
        meta.append(m)

    vecs = jnp.stack(rows, axis=0)                   # [R, VP] f32
    return weights, vecs, meta


# ----------------------------------------------------------------------------
# Forward pass (single fused pallas_call, batch-tiled grid)
# ----------------------------------------------------------------------------
def decoder_forward(x, params, *, dropout=0.0, final="none", norm=False,
                    eps=1e-5, tile_batch=1024, compute_dtype=jnp.float32):
    assert dropout == 0.0, "only eval-mode / p=0.0 dropout is supported"
    final = final.lower()
    if final not in ("none", "relu", "sigmoid"):
        raise TypeError("final activation function not recognized")

    weights, vecs, meta = prepare_decoder_params(
        params, norm=norm, compute_dtype=compute_dtype)

    B, in_f = x.shape
    assert in_f == meta[0]["in_true"], "input feature dim mismatch"
    out_true = meta[-1]["n_true"]

    # Batch tile: big (default 1024 rows) for HBM-roofline efficiency, shrunk
    # (sublane-rounded) for tiny batches.  grid = cdiv(B, TB): the edge block
    # is handled by Pallas padding on read / masking on write.
    tile_batch = _round_up(max(int(tile_batch), SUBLANE), SUBLANE)
    TB = min(tile_batch, _round_up(B, SUBLANE))
    grid = (pl.cdiv(B, TB),)

    # VMEM budget: all parameters are VMEM-resident (single-buffered), plus
    # double-buffered input/output activation blocks and LN/matmul temps.
    itemsize = jnp.dtype(compute_dtype).itemsize
    param_bytes = sum(int(w.size) * itemsize for w in weights) + int(vecs.size) * 4
    widest = max(m["out_pad"] for m in meta)
    act_bytes = TB * (2 * in_f + 2 * out_true + 6 * widest) * 4
    need = param_bytes + act_bytes
    if need > (100 << 20):
        # TODO(synk): stream / N-tile large weights instead of VMEM-residency.
        raise NotImplementedError(
            "decoder too large for the all-weights-VMEM-resident kernel")
    vmem_limit = None
    if need > (24 << 20):
        vmem_limit = int(min(max(need * 5 // 4, 32 << 20), 127 << 20))

    kernel = _make_decoder_kernel(meta, norm=norm, final=final, eps=eps,
                                  compute_dtype=compute_dtype)

    # Parameters: whole-array VMEM-resident (copied once, single-buffered).
    param_spec = pl.BlockSpec(memory_space=pltpu.MemorySpace.VMEM)
    in_specs = [pl.BlockSpec((TB, in_f), lambda i: (i, 0)),   # x (pipelined)
                param_spec]                                   # packed vectors
    in_specs += [param_spec] * len(weights)                   # weights
    out_spec = pl.BlockSpec((TB, out_true), lambda i: (i, 0))

    out = pl.pallas_call(
        kernel,
        out_shape=jax.ShapeDtypeStruct((B, out_true), jnp.float32),
        grid=grid,
        in_specs=in_specs,
        out_specs=out_spec,
        compiler_params=pltpu.CompilerParams(
            dimension_semantics=("parallel",),
            vmem_limit_bytes=vmem_limit),
    )(x.astype(jnp.float32), vecs, *weights)

    return out


# ----------------------------------------------------------------------------
# Parameter init (mimics nn.Linear / nn.LayerNorm defaults) + pure-JAX ref
# ----------------------------------------------------------------------------
def init_decoder_params(key, hidden):
    params = []
    for i in range(len(hidden) - 1):
        fan_in, fan_out = hidden[i], hidden[i + 1]
        key, kw, kb = jax.random.split(key, 3)
        bound = 1.0 / jnp.sqrt(fan_in)
        w = jax.random.uniform(kw, (fan_out, fan_in), jnp.float32, -bound, bound)
        b = jax.random.uniform(kb, (fan_out,), jnp.float32, -bound, bound)
        gamma = jnp.ones((fan_out,), jnp.float32)
        beta = jnp.zeros((fan_out,), jnp.float32)
        params.append(dict(w=w, b=b, gamma=gamma, beta=beta))
    return params


def decoder_forward_ref(x, params, *, final="none", norm=False, eps=1e-5):
    n = len(params)
    h = x.astype(jnp.float32)
    for i, p in enumerate(params):
        h = h @ p["w"].T + p["b"]
        if i < n - 1:
            if norm:
                mu = h.mean(-1, keepdims=True)
                var = ((h - mu) ** 2).mean(-1, keepdims=True)
                h = (h - mu) / jnp.sqrt(var + eps) * p["gamma"] + p["beta"]
            h = jnp.maximum(h, 0.0)
    f = final.lower()
    if f == "sigmoid":
        h = jax.nn.sigmoid(h)
    elif f == "relu":
        h = jnp.maximum(h, 0.0)
    return h


if __name__ == "__main__":
    hidden = [32, 64, 48, 16]
    dropout = 0.0
    final = "sigmoid"
    norm = True

    key = jax.random.PRNGKey(0)
    kx, kp, kx2 = jax.random.split(key, 3)
    params = init_decoder_params(kp, hidden)

    # --- small batch (single grid step, unpadded in/out feature dims) ----
    batch = 8
    x = jax.random.normal(kx, (batch, hidden[0]), jnp.float32)
    out = decoder_forward(x, params, dropout=dropout, final=final, norm=norm)
    out = jax.block_until_ready(out)
    ref = decoder_forward_ref(x, params, final=final, norm=norm)
    assert out.shape == (batch, hidden[-1])
    assert jnp.allclose(out, ref, atol=1e-4, rtol=1e-4), "mismatch (batch=8)"

    # --- larger, non-divisible batch: multi-step grid + masked edge block -
    batch2 = 200
    x2 = jax.random.normal(kx2, (batch2, hidden[0]), jnp.float32)
    out2 = decoder_forward(x2, params, dropout=dropout, final=final, norm=norm,
                           tile_batch=64)
    out2 = jax.block_until_ready(out2)
    ref2 = decoder_forward_ref(x2, params, final=final, norm=norm)
    assert out2.shape == (batch2, hidden[-1])
    assert jnp.allclose(out2, ref2, atol=1e-4, rtol=1e-4), "mismatch (batch=200)"

    # --- bf16 weight / MXU path (f32 accumulation), looser tolerance ------
    out3 = decoder_forward(x2, params, dropout=dropout, final=final, norm=norm,
                           compute_dtype=jnp.bfloat16)
    out3 = jax.block_until_ready(out3)
    assert jnp.allclose(out3, ref2, atol=5e-2, rtol=5e-2), "mismatch (bf16)"

    # --- no-norm / no-final variant ---------------------------------------
    out4 = decoder_forward(x2, params, dropout=dropout, final="none", norm=False)
    out4 = jax.block_until_ready(out4)
    ref4 = decoder_forward_ref(x2, params, final="none", norm=False)
    assert jnp.allclose(out4, ref4, atol=1e-4, rtol=1e-4), "mismatch (no-norm)"

    print("KERNEL_OK")
</pallas_src>

<mosaic_0001>
module attributes {stable_mosaic.version = 11 : i64} {
  func.func @kernel(%arg0: i32, %arg1: memref<8x32xf32, #tpu.memory_space<vmem>>, %arg2: memref<7x128xf32, #tpu.memory_space<vmem>>, %arg3: memref<32x128xf32, #tpu.memory_space<vmem>>, %arg4: memref<128x128xf32, #tpu.memory_space<vmem>>, %arg5: memref<128x16xf32, #tpu.memory_space<vmem>>, %arg6: memref<8x16xf32, #tpu.memory_space<vmem>>) attributes {dimension_semantics = [#tpu.dimension_semantics<parallel>], iteration_bounds = array<i64: 1>, scalar_prefetch = 0 : i64, scratch_operands = 0 : i64, tpu.core_type = #tpu.core_type<tc>, window_params = [{transform_indices = @transform_0, window_bounds = array<i64: 8, 32>}, {pipeline_mode = #tpu.pipeline_mode<synchronous>, transform_indices = @transform_1, window_bounds = array<i64: 7, 128>}, {pipeline_mode = #tpu.pipeline_mode<synchronous>, transform_indices = @transform_2, window_bounds = array<i64: 32, 128>}, {pipeline_mode = #tpu.pipeline_mode<synchronous>, transform_indices = @transform_3, window_bounds = array<i64: 128, 128>}, {pipeline_mode = #tpu.pipeline_mode<synchronous>, transform_indices = @transform_4, window_bounds = array<i64: 128, 16>}, {transform_indices = @transform_5, window_bounds = array<i64: 8, 16>}]} {
    %c0 = arith.constant 0 : index
    %c0_0 = arith.constant 0 : index
    %0 = vector.load %arg1[%c0, %c0_0] : memref<8x32xf32, #tpu.memory_space<vmem>>, vector<8x32xf32>
    %c0_1 = arith.constant 0 : index
    %c0_2 = arith.constant 0 : index
    %1 = vector.load %arg2[%c0_1, %c0_2] : memref<7x128xf32, #tpu.memory_space<vmem>>, vector<1x128xf32>
    %c0_3 = arith.constant 0 : index
    %c0_4 = arith.constant 0 : index
    %2 = vector.load %arg3[%c0_3, %c0_4] : memref<32x128xf32, #tpu.memory_space<vmem>>, vector<32x128xf32>
    %cst = arith.constant dense<0.000000e+00> : vector<8x128xf32>
    %3 = tpu.matmul %0, %2, %cst {dimension_numbers = #tpu.dot_dimension_numbers<[1], [0], [0], [1], [0, 0, 1, 1], [], []>} : vector<8x32xf32>, vector<32x128xf32>, vector<8x128xf32> -> vector<8x128xf32>
    %4 = vector.broadcast %1 : vector<1x128xf32> to vector<8x128xf32>
    %5 = arith.addf %3, %4 : vector<8x128xf32>
    %c1 = arith.constant 1 : index
    %c0_5 = arith.constant 0 : index
    %6 = vector.load %arg2[%c1, %c0_5] : memref<7x128xf32, #tpu.memory_space<vmem>>, vector<1x128xf32>
    %c2 = arith.constant 2 : index
    %c0_6 = arith.constant 0 : index
    %7 = vector.load %arg2[%c2, %c0_6] : memref<7x128xf32, #tpu.memory_space<vmem>>, vector<1x128xf32>
    %cst_7 = arith.constant dense<0.000000e+00> : vector<8xf32>
    %8 = vector.multi_reduction <add>, %5, %cst_7 [1] : vector<8x128xf32> to vector<8xf32>
    %9 = vector.shape_cast %8 : vector<8xf32> to vector<8x1xf32>
    %10 = arith.mulf %5, %5 : vector<8x128xf32>
    %cst_8 = arith.constant dense<0.000000e+00> : vector<8xf32>
    %11 = vector.multi_reduction <add>, %10, %cst_8 [1] : vector<8x128xf32> to vector<8xf32>
    %12 = vector.shape_cast %11 : vector<8xf32> to vector<8x1xf32>
    %cst_9 = arith.constant 1.562500e-02 : f32
    %13 = vector.broadcast %cst_9 : f32 to vector<8x1xf32>
    %14 = arith.mulf %9, %13 : vector<8x1xf32>
    %cst_10 = arith.constant 1.562500e-02 : f32
    %15 = vector.broadcast %cst_10 : f32 to vector<8x1xf32>
    %16 = arith.mulf %12, %15 : vector<8x1xf32>
    %17 = arith.mulf %14, %14 : vector<8x1xf32>
    %18 = arith.subf %16, %17 : vector<8x1xf32>
    %19 = vector.broadcast %14 : vector<8x1xf32> to vector<8x128xf32>
    %20 = arith.subf %5, %19 : vector<8x128xf32>
    %cst_11 = arith.constant 9.99999974E-6 : f32
    %21 = vector.broadcast %cst_11 : f32 to vector<8x1xf32>
    %22 = arith.addf %18, %21 : vector<8x1xf32>
    %23 = math.rsqrt %22 : vector<8x1xf32>
    %24 = vector.broadcast %23 : vector<8x1xf32> to vector<8x128xf32>
    %25 = arith.mulf %20, %24 : vector<8x128xf32>
    %26 = vector.broadcast %6 : vector<1x128xf32> to vector<8x128xf32>
    %27 = arith.mulf %25, %26 : vector<8x128xf32>
    %28 = vector.broadcast %7 : vector<1x128xf32> to vector<8x128xf32>
    %29 = arith.addf %27, %28 : vector<8x128xf32>
    %cst_12 = arith.constant 0.000000e+00 : f32
    %30 = vector.broadcast %cst_12 : f32 to vector<8x128xf32>
    %31 = arith.maximumf %29, %30 : vector<8x128xf32>
    %c3 = arith.constant 3 : index
    %c0_13 = arith.constant 0 : index
    %32 = vector.load %arg2[%c3, %c0_13] : memref<7x128xf32, #tpu.memory_space<vmem>>, vector<1x128xf32>
    %c0_14 = arith.constant 0 : index
    %c0_15 = arith.constant 0 : index
    %33 = vector.load %arg4[%c0_14, %c0_15] : memref<128x128xf32, #tpu.memory_space<vmem>>, vector<128x128xf32>
    %cst_16 = arith.constant dense<0.000000e+00> : vector<8x128xf32>
    %34 = tpu.matmul %31, %33, %cst_16 {dimension_numbers = #tpu.dot_dimension_numbers<[1], [0], [0], [1], [0, 0, 1, 1], [], []>} : vector<8x128xf32>, vector<128x128xf32>, vector<8x128xf32> -> vector<8x128xf32>
    %35 = vector.broadcast %32 : vector<1x128xf32> to vector<8x128xf32>
    %36 = arith.addf %34, %35 : vector<8x128xf32>
    %c4 = arith.constant 4 : index
    %c0_17 = arith.constant 0 : index
    %37 = vector.load %arg2[%c4, %c0_17] : memref<7x128xf32, #tpu.memory_space<vmem>>, vector<1x128xf32>
    %c5 = arith.constant 5 : index
    %c0_18 = arith.constant 0 : index
    %38 = vector.load %arg2[%c5, %c0_18] : memref<7x128xf32, #tpu.memory_space<vmem>>, vector<1x128xf32>
    %cst_19 = arith.constant dense<0.000000e+00> : vector<8xf32>
    %39 = vector.multi_reduction <add>, %36, %cst_19 [1] : vector<8x128xf32> to vector<8xf32>
    %40 = vector.shape_cast %39 : vector<8xf32> to vector<8x1xf32>
    %41 = arith.mulf %36, %36 : vector<8x128xf32>
    %cst_20 = arith.constant dense<0.000000e+00> : vector<8xf32>
    %42 = vector.multi_reduction <add>, %41, %cst_20 [1] : vector<8x128xf32> to vector<8xf32>
    %43 = vector.shape_cast %42 : vector<8xf32> to vector<8x1xf32>
    %cst_21 = arith.constant 0.020833334 : f32
    %44 = vector.broadcast %cst_21 : f32 to vector<8x1xf32>
    %45 = arith.mulf %40, %44 : vector<8x1xf32>
    %cst_22 = arith.constant 0.020833334 : f32
    %46 = vector.broadcast %cst_22 : f32 to vector<8x1xf32>
    %47 = arith.mulf %43, %46 : vector<8x1xf32>
    %48 = arith.mulf %45, %45 : vector<8x1xf32>
    %49 = arith.subf %47, %48 : vector<8x1xf32>
    %50 = vector.broadcast %45 : vector<8x1xf32> to vector<8x128xf32>
    %51 = arith.subf %36, %50 : vector<8x128xf32>
    %cst_23 = arith.constant 9.99999974E-6 : f32
    %52 = vector.broadcast %cst_23 : f32 to vector<8x1xf32>
    %53 = arith.addf %49, %52 : vector<8x1xf32>
    %54 = math.rsqrt %53 : vector<8x1xf32>
    %55 = vector.broadcast %54 : vector<8x1xf32> to vector<8x128xf32>
    %56 = arith.mulf %51, %55 : vector<8x128xf32>
    %57 = vector.broadcast %37 : vector<1x128xf32> to vector<8x128xf32>
    %58 = arith.mulf %56, %57 : vector<8x128xf32>
    %59 = vector.broadcast %38 : vector<1x128xf32> to vector<8x128xf32>
    %60 = arith.addf %58, %59 : vector<8x128xf32>
    %cst_24 = arith.constant 0.000000e+00 : f32
    %61 = vector.broadcast %cst_24 : f32 to vector<8x128xf32>
    %62 = arith.maximumf %60, %61 : vector<8x128xf32>
    %c6 = arith.constant 6 : index
    %c0_25 = arith.constant 0 : index
    %63 = vector.load %arg2[%c6, %c0_25] : memref<7x128xf32, #tpu.memory_space<vmem>>, vector<1x16xf32>
    %c0_26 = arith.constant 0 : index
    %c0_27 = arith.constant 0 : index
    %64 = vector.load %arg5[%c0_26, %c0_27] : memref<128x16xf32, #tpu.memory_space<vmem>>, vector<128x16xf32>
    %cst_28 = arith.constant dense<0.000000e+00> : vector<8x16xf32>
    %65 = tpu.matmul %62, %64, %cst_28 {dimension_numbers = #tpu.dot_dimension_numbers<[1], [0], [0], [1], [0, 0, 1, 1], [], []>} : vector<8x128xf32>, vector<128x16xf32>, vector<8x16xf32> -> vector<8x16xf32>
    %66 = vector.broadcast %63 : vector<1x16xf32> to vector<8x16xf32>
    %67 = arith.addf %65, %66 : vector<8x16xf32>
    %68 = arith.negf %67 : vector<8x16xf32>
    %69 = math.exp %68 : vector<8x16xf32>
    %cst_29 = arith.constant 1.000000e+00 : f32
    %70 = vector.broadcast %cst_29 : f32 to vector<8x16xf32>
    %71 = arith.addf %70, %69 : vector<8x16xf32>
    %72 = arith.divf %70, %71 : vector<8x16xf32>
    %c0_30 = arith.constant 0 : index
    %c0_31 = arith.constant 0 : index
    %73 = vector.load %arg6[%c0_30, %c0_31] : memref<8x16xf32, #tpu.memory_space<vmem>>, vector<8x16xf32>
    tpu.vector_store %arg6[%c0_30, %c0_31], %72 {strides = array<i32>} : memref<8x16xf32, #tpu.memory_space<vmem>>, vector<8x16xf32>,
    return
  }
  func.func @transform_0(%arg0: i32) -> (i32, i32) {
    %c0_i32 = arith.constant 0 : i32
    %c0_i32_0 = arith.constant 0 : i32
    return %arg0, %c0_i32 : i32, i32
  }
  func.func @transform_1(%arg0: i32) -> (i32, i32) {
    %c0_i32 = arith.constant 0 : i32
    %c0_i32_0 = arith.constant 0 : i32
    %c0_i32_1 = arith.constant 0 : i32
    return %c0_i32, %c0_i32_0 : i32, i32
  }
  func.func @transform_2(%arg0: i32) -> (i32, i32) {
    %c0_i32 = arith.constant 0 : i32
    %c0_i32_0 = arith.constant 0 : i32
    %c0_i32_1 = arith.constant 0 : i32
    return %c0_i32, %c0_i32_0 : i32, i32
  }
  func.func @transform_3(%arg0: i32) -> (i32, i32) {
    %c0_i32 = arith.constant 0 : i32
    %c0_i32_0 = arith.constant 0 : i32
    %c0_i32_1 = arith.constant 0 : i32
    return %c0_i32, %c0_i32_0 : i32, i32
  }
  func.func @transform_4(%arg0: i32) -> (i32, i32) {
    %c0_i32 = arith.constant 0 : i32
    %c0_i32_0 = arith.constant 0 : i32
    %c0_i32_1 = arith.constant 0 : i32
    return %c0_i32, %c0_i32_0 : i32, i32
  }
  func.func @transform_5(%arg0: i32) -> (i32, i32) {
    %c0_i32 = arith.constant 0 : i32
    %c0_i32_0 = arith.constant 0 : i32
    return %arg0, %c0_i32 : i32, i32
  }
}

</mosaic_0001>

<llo_original>
// kernel: tpu_custom_call.1
$region0: #{tpu_custom_call.1}
  #allocation0 [shape = 'u32[]', space=smem, size = 0x4, offset = 0x4, fixed_abs, tag = 'smem constant byte address 0x4 - core index']
  #allocation1 [shape = 'u32[144,128]{1,0:T(1,128)}', space=vmem, size = 0x12000, scoped, tag = 'internal scratch']
  %s0 = inlined_call_operand.vmem [shape: f32[8,32], index: 0, kind: input, shape index: {}]
  %s1 = inlined_call_operand.vmem [shape: f32[7,128], index: 1, kind: input, shape index: {}]
  %s2 = inlined_call_operand.hbm [shape: f32[32,128], index: 2, kind: input, shape index: {}]
  %s3 = inlined_call_operand.vmem [shape: f32[128,128], index: 3, kind: input, shape index: {}]
  %s4 = inlined_call_operand.vmem [shape: f32[128,16], index: 4, kind: input, shape index: {}]
  %s5 = inlined_call_operand.hbm [shape: f32[8,16], index: 5, kind: output, shape index: {}]
  %s6 = sld [smem:[#allocation0]]
  $region34: #{tpu_custom_call.1} parent=0
    _
  %s8 = ssub.s32 1, %s6
  %s9 = scalar_select 0, %s8, %s6
  $region1: #{tpu_custom_call.1} parent=0
    #allocation2 [shape = 'u8[16384]{0}', space=vmem, size = 0x4000, scoped, tag = 'input window, operand 2, single buffered']
    #allocation3 [shape = 's32[1]{0}', space=sflag, size = 0x4, scoped, tag = 'scoped memory for tpu_custom_call.1']
    #allocation4 [shape = 's32[1]{0}', space=sflag, size = 0x4, scoped, tag = 'scoped memory for tpu_custom_call.1']
    #allocation5 [shape = 'u8[4096]{0}', space=vmem, size = 0x1000, scoped, tag = 'output window, operand 0, single buffered']
    %10 = vsyncpa [#allocation3], 0
    %11 = vsyncpa [#allocation4], 0
    // Predicated region
    $region2: #{tpu_custom_call.1} parent=1 // pred_check
      _
    $region3: #{tpu_custom_call.1} parent=1 // pred_check_branch
      %13 = sbr.rel (0) target = $region5
    $region4: #{tpu_custom_call.1} parent=1 // pred_region
      _
    $region5: #{tpu_custom_call.1} parent=1 // pred_fallthru
      _
    // Predicated region
    $region6: #{tpu_custom_call.1} parent=1 // pred_check
      _
    $region7: #{tpu_custom_call.1} parent=1 // pred_check_branch
      %15 = sbr.rel (0) target = $region9
    $region8: #{tpu_custom_call.1} parent=1 // pred_region
      _
    $region9: #{tpu_custom_call.1} parent=1 // pred_fallthru
      _
    // Predicated region
    $region10: #{tpu_custom_call.1} parent=1 // pred_check
      _
    $region11: #{tpu_custom_call.1} parent=1 // pred_check_branch
      %17 = sbr.rel (0) target = $region13
    $region12: #{tpu_custom_call.1} parent=1 // pred_region
      %s19 = ssub.s32 512, 512
      %20 = vsyncadd [#allocation3], %s19
      %s21 = sshll.u32 [#allocation2], 4
      %s22 = int_to_ptr.vmem [resolvable:$true] %s21
      %27 = dma.hbm_to_vmem [thread:$0]  %s2, 512, %s22, [#allocation3], 128, 128, 8
    $region13: #{tpu_custom_call.1} parent=1 // pred_fallthru
      _
    // Predicated region
    $region14: #{tpu_custom_call.1} parent=1 // pred_check
      _
    $region15: #{tpu_custom_call.1} parent=1 // pred_check_branch
      %29 = sbr.rel (0) target = $region17
    $region16: #{tpu_custom_call.1} parent=1 // pred_region
      _
    $region17: #{tpu_custom_call.1} parent=1 // pred_fallthru
      _
    // Predicated region
    $region18: #{tpu_custom_call.1} parent=1 // pred_check
      _
    $region19: #{tpu_custom_call.1} parent=1 // pred_check_branch
      %31 = sbr.rel (0) target = $region21
    $region20: #{tpu_custom_call.1} parent=1 // pred_region
      _
    $region21: #{tpu_custom_call.1} parent=1 // pred_fallthru
      _
    // Predicated region
    $region22: #{tpu_custom_call.1} parent=1 // pred_check
      _
    $region23: #{tpu_custom_call.1} parent=1 // pred_check_branch
      %33 = sbr.rel (0) target = $region25
    $region24: #{tpu_custom_call.1} parent=1 // pred_region
      %34 = dma.done [#allocation3], 512
    $region25: #{tpu_custom_call.1} parent=1 // pred_fallthru
      _
    %v35 = vld [vmem:[%s0] sm:$0xff]
    %v36 = vld [vmem:[%s1] sm:$0x1]
    %v37 = vld [vmem:[#allocation2] sm:$0xff]
    %v38 = vld [vmem:[#allocation2 + $0x8] sm:$0xff]
    %v39 = vld [vmem:[#allocation2 + $0x10] sm:$0xff]
    %v40 = vld [vmem:[#allocation2 + $0x18] sm:$0xff]
    %v41 = vlaneseq
    %v42 = vshrl.u32 %v41, 7
    %v43 = vsub.s32 0, %v42
    %v44 = vrot.slane %v36, %v43
    %vm45 = vcmask 261120
    %v47 = vsel %vm45, %v35, 0
    %49 = vmatprep.subr.mxu0 0.0
    %50 = vmatpush1.msra.mxu0 0.0
    %51 = vmatprep.subr.mxu0 0.0
    %52 = vmatpush1.msra.mxu0 0.0
    %53 = vmatprep.subr.mxu0 0.0
    %54 = vmatpush1.msra.mxu0 0.0
    %55 = vmatprep.subr.mxu0 0.0
    %56 = vmatpush1.msra.mxu0 0.0
    %57 = vmatprep.subr.mxu0 0.0
    %58 = vmatpush1.msra.mxu0 0.0
    %59 = vmatprep.subr.mxu0 0.0
    %60 = vmatpush1.msra.mxu0 0.0
    %61 = vmatprep.subr.mxu0 0.0
    %62 = vmatpush1.msra.mxu0 0.0
    %63 = vmatprep.subr.mxu0 0.0
    %64 = vmatpush1.msra.mxu0 0.0
    %65 = vmatprep.subr.mxu0 0.0
    %66 = vmatpush1.msra.mxu0 0.0
    %67 = vmatprep.subr.mxu0 0.0
    %68 = vmatpush1.msra.mxu0 0.0
    %69 = vmatprep.subr.mxu0 0.0
    %70 = vmatpush1.msra.mxu0 0.0
    %71 = vmatprep.subr.mxu0 0.0
    %72 = vmatpush1.msra.mxu0 0.0
    %73 = vmatprep.subr.mxu0 0.0
    %74 = vmatpush1.msra.mxu0 %v40
    %75 = vmatprep.subr.mxu0 0.0
    %76 = vmatpush1.msra.mxu0 %v39
    %77 = vmatprep.subr.mxu0 0.0
    %78 = vmatpush1.msra.mxu0 %v38
    %79 = vmatprep.subr.mxu0 0.0
    %80 = vmatpush1.msra.mxu0 %v37
    %81 = vmatprep.subr.mxu0 0.0
    %82 = vmatpush2.msra.mxu0 0.0
    %83 = vmatprep.subr.mxu0 0.0
    %84 = vmatpush2.msra.mxu0 0.0
    %85 = vmatprep.subr.mxu0 0.0
    %86 = vmatpush2.msra.mxu0 0.0
    %87 = vmatprep.subr.mxu0 0.0
    %88 = vmatpush2.msra.mxu0 0.0
    %89 = vmatprep.subr.mxu0 0.0
    %90 = vmatpush2.msra.mxu0 0.0
    %91 = vmatprep.subr.mxu0 0.0
    %92 = vmatpush2.msra.mxu0 0.0
    %93 = vmatprep.subr.mxu0 0.0
    %94 = vmatpush2.msra.mxu0 0.0
    %95 = vmatprep.subr.mxu0 0.0
    %96 = vmatpush2.msra.mxu0 0.0
    %97 = vmatprep.subr.mxu0 0.0
    %98 = vmatpush2.msra.mxu0 0.0
    %99 = vmatprep.subr.mxu0 0.0
    %100 = vmatpush2.msra.mxu0 0.0
    %101 = vmatprep.subr.mxu0 0.0
    %102 = vmatpush2.msra.mxu0 0.0
    %103 = vmatprep.subr.mxu0 0.0
    %104 = vmatpush2.msra.mxu0 0.0
    %105 = vmatprep.subr.mxu0 0.0
    %106 = vmatpush2.msra.mxu0 0.0
    %107 = vmatprep.subr.mxu0 0.0
    %108 = vmatpush2.msra.mxu0 0.0
    %109 = vmatprep.subr.mxu0 0.0
    %110 = vmatpush2.msra.mxu0 0.0
    %111 = vmatprep.subr.mxu0 0.0
    %112 = vmatpush2.msra.mxu0 0.0
    %113 = vmatprep.mubr.f32.mxu0 0.0
    %114 = vmatmul.mubr.f32.gmra.mxu0 %v47
    %v115 = vpop.f32.mrf.mxu0
    %v116 = vadd.f32 %v44, %v115
    %v117 = vpop.f32.mrf.mxu0
    %118 = vdwg.mxu0
    %v119 = vld [vmem:[%s1 + $0x1] sm:$0x1]
    %v120 = vld [vmem:[%s1 + $0x2] sm:$0x1]
    %121 = vadd.xlane.f32.xlu0 %v116
    %v122 = vpop.xlane.xlu0 %121
    %v123 = vmul.f32 %v116, %v116
    %124 = vadd.xlane.f32.xlu0 %v123
    %v125 = vpop.xlane.xlu0 %124
    %v126 = vmul.f32 %v122, 0.015625
    %v127 = vmul.f32 %v125, 0.015625
    %v128 = vmul.f32 %v126, %v126
    %v129 = vsub.f32 %v127, %v128
    %v130 = vsub.f32 %v116, %v126
    %v131 = vadd.f32 %v129, 1e-05
    %v132 = vrsqrt.pop %v131
    %v133 = vmul.f32 %v130, %v132
    %v134 = vlaneseq
    %v135 = vshrl.u32 %v134, 7
    %v136 = vsub.s32 0, %v135
    %v137 = vrot.slane %v119, %v136
    %v138 = vmul.f32 %v133, %v137
    %v139 = vlaneseq
    %v140 = vshrl.u32 %v139, 7
    %v141 = vsub.s32 0, %v140
    %v142 = vrot.slane %v120, %v141
    %v143 = vadd.f32 %v138, %v142
    %v144 = vmax.f32 %v143, 0.0
    %v145 = vld [vmem:[%s1 + $0x3] sm:$0x1]
    %v146 = vld [vmem:[%s3] sm:$0xff]
    %v147 = vld [vmem:[%s3 + $0x8] sm:$0xff]
    %v148 = vld [vmem:[%s3 + $0x10] sm:$0xff]
    %v149 = vld [vmem:[%s3 + $0x18] sm:$0xff]
    %v150 = vld [vmem:[%s3 + $0x20] sm:$0xff]
    %v151 = vld [vmem:[%s3 + $0x28] sm:$0xff]
    %v152 = vld [vmem:[%s3 + $0x30] sm:$0xff]
    %v153 = vld [vmem:[%s3 + $0x38] sm:$0xff]
    %v154 = vld [vmem:[%s3 + $0x40] sm:$0xff]
    %v155 = vld [vmem:[%s3 + $0x48] sm:$0xff]
    %v156 = vld [vmem:[%s3 + $0x50] sm:$0xff]
    %v157 = vld [vmem:[%s3 + $0x58] sm:$0xff]
    %v158 = vld [vmem:[%s3 + $0x60] sm:$0xff]
    %v159 = vld [vmem:[%s3 + $0x68] sm:$0xff]
    %v160 = vld [vmem:[%s3 + $0x70] sm:$0xff]
    %v161 = vld [vmem:[%s3 + $0x78] sm:$0xff]
    %v162 = vlaneseq
    %v163 = vshrl.u32 %v162, 7
    %v164 = vsub.s32 0, %v163
    %v165 = vrot.slane %v145, %v164
    %166 = vmatprep.subr.mxu0 0.0
    %167 = vmatpush1.msra.mxu0 %v161
    %168 = vmatprep.subr.mxu0 0.0
    %169 = vmatpush1.msra.mxu0 %v160
    %170 = vmatprep.subr.mxu0 0.0
    %171 = vmatpush1.msra.mxu0 %v159
    %172 = vmatprep.subr.mxu0 0.0
    %173 = vmatpush1.msra.mxu0 %v158
    %174 = vmatprep.subr.mxu0 0.0
    %175 = vmatpush1.msra.mxu0 %v157
    %176 = vmatprep.subr.mxu0 0.0
    %177 = vmatpush1.msra.mxu0 %v156
    %178 = vmatprep.subr.mxu0 0.0
    %179 = vmatpush1.msra.mxu0 %v155
    %180 = vmatprep.subr.mxu0 0.0
    %181 = vmatpush1.msra.mxu0 %v154
    %182 = vmatprep.subr.mxu0 0.0
    %183 = vmatpush1.msra.mxu0 %v153
    %184 = vmatprep.subr.mxu0 0.0
    %185 = vmatpush1.msra.mxu0 %v152
    %186 = vmatprep.subr.mxu0 0.0
    %187 = vmatpush1.msra.mxu0 %v151
    %188 = vmatprep.subr.mxu0 0.0
    %189 = vmatpush1.msra.mxu0 %v150
    %190 = vmatprep.subr.mxu0 0.0
    %191 = vmatpush1.msra.mxu0 %v149
    %192 = vmatprep.subr.mxu0 0.0
    %193 = vmatpush1.msra.mxu0 %v148
    %194 = vmatprep.subr.mxu0 0.0
    %195 = vmatpush1.msra.mxu0 %v147
    %196 = vmatprep.subr.mxu0 0.0
    %197 = vmatpush1.msra.mxu0 %v146
    %198 = vmatprep.subr.mxu0 0.0
    %199 = vmatpush2.msra.mxu0 0.0
    %200 = vmatprep.subr.mxu0 0.0
    %201 = vmatpush2.msra.mxu0 0.0
    %202 = vmatprep.subr.mxu0 0.0
    %203 = vmatpush2.msra.mxu0 0.0
    %204 = vmatprep.subr.mxu0 0.0
    %205 = vmatpush2.msra.mxu0 0.0
    %206 = vmatprep.subr.mxu0 0.0
    %207 = vmatpush2.msra.mxu0 0.0
    %208 = vmatprep.subr.mxu0 0.0
    %209 = vmatpush2.msra.mxu0 0.0
    %210 = vmatprep.subr.mxu0 0.0
    %211 = vmatpush2.msra.mxu0 0.0
    %212 = vmatprep.subr.mxu0 0.0
    %213 = vmatpush2.msra.mxu0 0.0
    %214 = vmatprep.subr.mxu0 0.0
    %215 = vmatpush2.msra.mxu0 0.0
    %216 = vmatprep.subr.mxu0 0.0
    %217 = vmatpush2.msra.mxu0 0.0
    %218 = vmatprep.subr.mxu0 0.0
    %219 = vmatpush2.msra.mxu0 0.0
    %220 = vmatprep.subr.mxu0 0.0
    %221 = vmatpush2.msra.mxu0 0.0
    %222 = vmatprep.subr.mxu0 0.0
    %223 = vmatpush2.msra.mxu0 0.0
    %224 = vmatprep.subr.mxu0 0.0
    %225 = vmatpush2.msra.mxu0 0.0
    %226 = vmatprep.subr.mxu0 0.0
    %227 = vmatpush2.msra.mxu0 0.0
    %228 = vmatprep.subr.mxu0 0.0
    %229 = vmatpush2.msra.mxu0 0.0
    %230 = vmatprep.mubr.f32.mxu0 0.0
    %231 = vmatmul.mubr.f32.gmra.mxu0 %v144
    %v232 = vpop.f32.mrf.mxu0
    %v233 = vadd.f32 %v165, %v232
    %v234 = vpop.f32.mrf.mxu0
    %235 = vdwg.mxu0
    %v236 = vld [vmem:[%s1 + $0x4] sm:$0x1]
    %v237 = vld [vmem:[%s1 + $0x5] sm:$0x1]
    %238 = vadd.xlane.f32.xlu0 %v233
    %v239 = vpop.xlane.xlu0 %238
    %v240 = vmul.f32 %v233, %v233
    %241 = vadd.xlane.f32.xlu0 %v240
    %v242 = vpop.xlane.xlu0 %241
    %v243 = vmul.f32 %v239, 0.020833334
    %v244 = vmul.f32 %v242, 0.020833334
    %v245 = vmul.f32 %v243, %v243
    %v246 = vsub.f32 %v244, %v245
    %v247 = vsub.f32 %v233, %v243
    %v248 = vadd.f32 %v246, 1e-05
    %v249 = vrsqrt.pop %v248
    %v250 = vmul.f32 %v247, %v249
    %v251 = vlaneseq
    %v252 = vshrl.u32 %v251, 7
    %v253 = vsub.s32 0, %v252
    %v254 = vrot.slane %v236, %v253
    %v255 = vmul.f32 %v250, %v254
    %v256 = vlaneseq
    %v257 = vshrl.u32 %v256, 7
    %v258 = vsub.s32 0, %v257
    %v259 = vrot.slane %v237, %v258
    %v260 = vadd.f32 %v255, %v259
    %v261 = vmax.f32 %v260, 0.0
    %v262 = vld [vmem:[%s1 + $0x6] sm:$0x1]
    %v263 = vld [vmem:[%s4] sm:$0xff]
    %v264 = vld [vmem:[%s4 + $0x8] sm:$0xff]
    %v265 = vld [vmem:[%s4 + $0x10] sm:$0xff]
    %v266 = vld [vmem:[%s4 + $0x18] sm:$0xff]
    %v267 = vld [vmem:[%s4 + $0x20] sm:$0xff]
    %v268 = vld [vmem:[%s4 + $0x28] sm:$0xff]
    %v269 = vld [vmem:[%s4 + $0x30] sm:$0xff]
    %v270 = vld [vmem:[%s4 + $0x38] sm:$0xff]
    %v271 = vld [vmem:[%s4 + $0x40] sm:$0xff]
    %v272 = vld [vmem:[%s4 + $0x48] sm:$0xff]
    %v273 = vld [vmem:[%s4 + $0x50] sm:$0xff]
    %v274 = vld [vmem:[%s4 + $0x58] sm:$0xff]
    %v275 = vld [vmem:[%s4 + $0x60] sm:$0xff]
    %v276 = vld [vmem:[%s4 + $0x68] sm:$0xff]
    %v277 = vld [vmem:[%s4 + $0x70] sm:$0xff]
    %v278 = vld [vmem:[%s4 + $0x78] sm:$0xff]
    %v279 = vlaneseq
    %v280 = vshrl.u32 %v279, 7
    %v281 = vsub.s32 0, %v280
    %v282 = vrot.slane %v262, %v281
    %283 = vmatprep.subr.mxu0 0.0
    %284 = vmatpush1.msra.mxu0 %v278
    %285 = vmatprep.subr.mxu0 0.0
    %286 = vmatpush1.msra.mxu0 %v277
    %287 = vmatprep.subr.mxu0 0.0
    %288 = vmatpush1.msra.mxu0 %v276
    %289 = vmatprep.subr.mxu0 0.0
    %290 = vmatpush1.msra.mxu0 %v275
    %291 = vmatprep.subr.mxu0 0.0
    %292 = vmatpush1.msra.mxu0 %v274
    %293 = vmatprep.subr.mxu0 0.0
    %294 = vmatpush1.msra.mxu0 %v273
    %295 = vmatprep.subr.mxu0 0.0
    %296 = vmatpush1.msra.mxu0 %v272
    %297 = vmatprep.subr.mxu0 0.0
    %298 = vmatpush1.msra.mxu0 %v271
    %299 = vmatprep.subr.mxu0 0.0
    %300 = vmatpush1.msra.mxu0 %v270
    %301 = vmatprep.subr.mxu0 0.0
    %302 = vmatpush1.msra.mxu0 %v269
    %303 = vmatprep.subr.mxu0 0.0
    %304 = vmatpush1.msra.mxu0 %v268
    %305 = vmatprep.subr.mxu0 0.0
    %306 = vmatpush1.msra.mxu0 %v267
    %307 = vmatprep.subr.mxu0 0.0
    %308 = vmatpush1.msra.mxu0 %v266
    %309 = vmatprep.subr.mxu0 0.0
    %310 = vmatpush1.msra.mxu0 %v265
    %311 = vmatprep.subr.mxu0 0.0
    %312 = vmatpush1.msra.mxu0 %v264
    %313 = vmatprep.subr.mxu0 0.0
    %314 = vmatpush1.msra.mxu0 %v263
    %315 = vmatprep.subr.mxu0 0.0
    %316 = vmatpush2.msra.mxu0 0.0
    %317 = vmatprep.subr.mxu0 0.0
    %318 = vmatpush2.msra.mxu0 0.0
    %319 = vmatprep.subr.mxu0 0.0
    %320 = vmatpush2.msra.mxu0 0.0
    %321 = vmatprep.subr.mxu0 0.0
    %322 = vmatpush2.msra.mxu0 0.0
    %323 = vmatprep.subr.mxu0 0.0
    %324 = vmatpush2.msra.mxu0 0.0
    %325 = vmatprep.subr.mxu0 0.0
    %326 = vmatpush2.msra.mxu0 0.0
    %327 = vmatprep.subr.mxu0 0.0
    %328 = vmatpush2.msra.mxu0 0.0
    %329 = vmatprep.subr.mxu0 0.0
    %330 = vmatpush2.msra.mxu0 0.0
    %331 = vmatprep.subr.mxu0 0.0
    %332 = vmatpush2.msra.mxu0 0.0
    %333 = vmatprep.subr.mxu0 0.0
    %334 = vmatpush2.msra.mxu0 0.0
    %335 = vmatprep.subr.mxu0 0.0
    %336 = vmatpush2.msra.mxu0 0.0
    %337 = vmatprep.subr.mxu0 0.0
    %338 = vmatpush2.msra.mxu0 0.0
    %339 = vmatprep.subr.mxu0 0.0
    %340 = vmatpush2.msra.mxu0 0.0
    %341 = vmatprep.subr.mxu0 0.0
    %342 = vmatpush2.msra.mxu0 0.0
    %343 = vmatprep.subr.mxu0 0.0
    %344 = vmatpush2.msra.mxu0 0.0
    %345 = vmatprep.subr.mxu0 0.0
    %346 = vmatpush2.msra.mxu0 0.0
    %347 = vmatprep.mubr.f32.mxu0 0.0
    %348 = vmatmul.mubr.f32.gmra.mxu0 %v261
    %v349 = vpop.f32.mrf.mxu0
    %v350 = vadd.f32 %v282, %v349
    %v351 = vpop.f32.mrf.mxu0
    %352 = vdwg.mxu0
    %v353 = vxor.u32 %v350, 2147483648
    %v354 = vmul.f32 %v353, 1.442695
    %v355 = vpow.pop %v354
    %v356 = vadd.f32 %v355, 1.0
    %v357 = vrcp.pop %v356
    %v358 = vmul.f32 1.0, %v357
    %vm359 = vcmask 130048
    %360 = vst.msk [vmem:[#allocation5] sm:$0xff] %vm359, %v358
    // Predicated region
    $region26: #{tpu_custom_call.1} parent=1 // pred_check
      _
    $region27: #{tpu_custom_call.1} parent=1 // pred_check_branch
      %362 = sbr.rel (0) target = $region29
    $region28: #{tpu_custom_call.1} parent=1 // pred_region
      %s364 = ssub.s32 128, 128
      %365 = vsyncadd [#allocation4], %s364
      %s367 = sshll.u32 [#allocation5], 4
      %s368 = int_to_ptr.vmem [resolvable:$true] %s367
      %370 = dma.vmem_to_hbm [thread:$0]  %s368, 128, %s5, [#allocation4]
    $region29: #{tpu_custom_call.1} parent=1 // pred_fallthru
      _
    // Predicated region
    $region30: #{tpu_custom_call.1} parent=1 // pred_check
      _
    $region31: #{tpu_custom_call.1} parent=1 // pred_check_branch
      %372 = sbr.rel (0) target = $region33
    $region32: #{tpu_custom_call.1} parent=1 // pred_region
      %373 = dma.done [#allocation4], 128
    $region33: #{tpu_custom_call.1} parent=1 // pred_fallthru
      _
    %374 = vsyncpa [#allocation3], 1
    %375 = vsyncpa [#allocation4], 1

</llo_original>
